<compile_context>
chip_gen: v7x
topology: tpu7x:2x2x1
jax: 0.10.0
libtpu: 0.0.40
codegen_flags: <defaults>
</compile_context>

<pallas_src>
import functools

import jax
import jax.numpy as jnp
from jax.experimental import pallas as pl
from jax.experimental.pallas import tpu as pltpu


def _linear_kernel(x_ref, w_ref, b_ref, o_ref):
    # x_ref: (tm, C_in) tile, w_ref: (C_in, C_out), b_ref: (1, C_out)
    acc = jnp.dot(x_ref[...], w_ref[...], preferred_element_type=jnp.float32)
    o_ref[...] = (acc + b_ref[...].astype(jnp.float32)).astype(o_ref.dtype)


def _round_up(x, m):
    return ((x + m - 1) // m) * m


@functools.partial(jax.jit, static_argnames=("tm",))
def extra_msa_embedder_fwd(x, w, b, *, tm=4096):
    """
    Args:
        x: [*, N_extra_seq, N_res, C_in]
        w: [C_in, C_out]   (transposed vs. torch nn.Linear.weight)
        b: [C_out]
    Returns:
        [*, N_extra_seq, N_res, C_out]
    """
    *batch_dims, c_in = x.shape
    c_out = w.shape[1]

    m = 1
    for d in batch_dims:
        m *= d
    # Contiguous collapse of leading dims -> free metadata reshape, no copy.
    x2d = x.reshape(m, c_in)

    # Row tile: multiple of 8, as large as requested but never (meaningfully)
    # larger than the row count. No padding: grid = ceil(m / tile_m) and the
    # ragged last block is masked by Pallas on load/store.
    tile_m = min(_round_up(tm, 8), _round_up(m, 8))
    grid_m = pl.cdiv(m, tile_m)

    b2d = b.reshape(1, c_out)

    x_bytes = jnp.dtype(x.dtype).itemsize
    cost = pl.CostEstimate(
        flops=2 * m * c_in * c_out,
        transcendentals=0,
        bytes_accessed=(
            m * c_in * x_bytes
            + c_in * c_out * jnp.dtype(w.dtype).itemsize
            + c_out * jnp.dtype(b.dtype).itemsize
            + m * c_out * x_bytes
        ),
    )

    # Double-buffered in/out tiles + params + slack; only raise the scoped
    # VMEM limit when we exceed the smallest default (16 MiB on v5e).
    vmem_needed = (
        2 * tile_m * (c_in + c_out) * max(x_bytes, 4)
        + (c_in * c_out + c_out) * 4
        + (2 << 20)
    )
    compiler_kwargs = dict(dimension_semantics=("parallel",))
    if vmem_needed > (16 << 20):
        compiler_kwargs["vmem_limit_bytes"] = int(min(vmem_needed, 48 << 20))

    out2d = pl.pallas_call(
        _linear_kernel,
        out_shape=jax.ShapeDtypeStruct((m, c_out), x.dtype),
        grid_spec=pltpu.PrefetchScalarGridSpec(
            num_scalar_prefetch=0,
            grid=(grid_m,),
            in_specs=[
                pl.BlockSpec((tile_m, c_in), lambda i: (i, 0)),
                pl.BlockSpec((c_in, c_out), lambda i: (0, 0)),
                pl.BlockSpec((1, c_out), lambda i: (0, 0)),
            ],
            out_specs=pl.BlockSpec((tile_m, c_out), lambda i: (i, 0)),
        ),
        compiler_params=pltpu.CompilerParams(**compiler_kwargs),
        cost_estimate=cost,
    )(x2d, w, b2d)

    return out2d.reshape(*batch_dims, c_out)


if __name__ == "__main__":
    # Small shapes consistent with the module's forward contract:
    # x: [batch, N_extra_seq, N_res, C_in]
    batch, n_extra_seq, n_res = 2, 8, 16
    c_in, c_out = 25, 64  # extra-MSA feature dim / embedding dim

    key = jax.random.PRNGKey(0)
    kx, kw, kb = jax.random.split(key, 3)

    x = jax.random.normal(kx, (batch, n_extra_seq, n_res, c_in), dtype=jnp.float32)
    # Deterministic synthetic parameters (lecun-normal-ish scale).
    w = jax.random.normal(kw, (c_in, c_out), dtype=jnp.float32) / jnp.sqrt(float(c_in))
    b = jax.random.normal(kb, (c_out,), dtype=jnp.float32) * 0.01

    out = extra_msa_embedder_fwd(x, w, b)
    out = jax.block_until_ready(out)

    # Sanity check against plain-JAX reference.
    ref = x @ w + b
    assert out.shape == (batch, n_extra_seq, n_res, c_out)
    assert jnp.allclose(out, ref, atol=1e-5, rtol=1e-5)

    print("KERNEL_OK")
</pallas_src>

<mosaic_0001>
module attributes {stable_mosaic.version = 11 : i64} {
  func.func @_linear_kernel(%arg0: i32, %arg1: memref<256x25xf32, #tpu.memory_space<vmem>>, %arg2: memref<25x64xf32, #tpu.memory_space<vmem>>, %arg3: memref<1x64xf32, #tpu.memory_space<vmem>>, %arg4: memref<256x64xf32, #tpu.memory_space<vmem>>) attributes {dimension_semantics = [#tpu.dimension_semantics<parallel>], iteration_bounds = array<i64: 1>, scalar_prefetch = 0 : i64, scratch_operands = 0 : i64, tpu.core_type = #tpu.core_type<tc>, window_params = [{transform_indices = @transform_0, window_bounds = array<i64: 256, 25>}, {pipeline_mode = #tpu.pipeline_mode<synchronous>, transform_indices = @transform_1, window_bounds = array<i64: 25, 64>}, {pipeline_mode = #tpu.pipeline_mode<synchronous>, transform_indices = @transform_2, window_bounds = array<i64: 1, 64>}, {transform_indices = @transform_3, window_bounds = array<i64: 256, 64>}]} {
    %c0 = arith.constant 0 : index
    %c0_0 = arith.constant 0 : index
    %0 = vector.load %arg1[%c0, %c0_0] : memref<256x25xf32, #tpu.memory_space<vmem>>, vector<256x25xf32>
    %c0_1 = arith.constant 0 : index
    %c0_2 = arith.constant 0 : index
    %1 = vector.load %arg2[%c0_1, %c0_2] : memref<25x64xf32, #tpu.memory_space<vmem>>, vector<25x64xf32>
    %cst = arith.constant dense<0.000000e+00> : vector<256x64xf32>
    %2 = tpu.matmul %0, %1, %cst {dimension_numbers = #tpu.dot_dimension_numbers<[1], [0], [0], [1], [0, 0, 1, 1], [], []>} : vector<256x25xf32>, vector<25x64xf32>, vector<256x64xf32> -> vector<256x64xf32>
    %c0_3 = arith.constant 0 : index
    %c0_4 = arith.constant 0 : index
    %3 = vector.load %arg3[%c0_3, %c0_4] : memref<1x64xf32, #tpu.memory_space<vmem>>, vector<1x64xf32>
    %4 = vector.broadcast %3 : vector<1x64xf32> to vector<256x64xf32>
    %5 = arith.addf %2, %4 : vector<256x64xf32>
    %c0_5 = arith.constant 0 : index
    %c0_6 = arith.constant 0 : index
    %6 = vector.load %arg4[%c0_5, %c0_6] : memref<256x64xf32, #tpu.memory_space<vmem>>, vector<256x64xf32>
    tpu.vector_store %arg4[%c0_5, %c0_6], %5 {strides = array<i32>} : memref<256x64xf32, #tpu.memory_space<vmem>>, vector<256x64xf32>,
    return
  }
  func.func @transform_0(%arg0: i32) -> (i32, i32) {
    %c0_i32 = arith.constant 0 : i32
    %c0_i32_0 = arith.constant 0 : i32
    return %arg0, %c0_i32 : i32, i32
  }
  func.func @transform_1(%arg0: i32) -> (i32, i32) {
    %c0_i32 = arith.constant 0 : i32
    %c0_i32_0 = arith.constant 0 : i32
    %c0_i32_1 = arith.constant 0 : i32
    return %c0_i32, %c0_i32_0 : i32, i32
  }
  func.func @transform_2(%arg0: i32) -> (i32, i32) {
    %c0_i32 = arith.constant 0 : i32
    %c0_i32_0 = arith.constant 0 : i32
    %c0_i32_1 = arith.constant 0 : i32
    return %c0_i32, %c0_i32_0 : i32, i32
  }
  func.func @transform_3(%arg0: i32) -> (i32, i32) {
    %c0_i32 = arith.constant 0 : i32
    %c0_i32_0 = arith.constant 0 : i32
    return %arg0, %c0_i32 : i32, i32
  }
}

</mosaic_0001>

<llo_original>
// kernel: extra_msa_embedder_fwd.1
$region0: #{extra_msa_embedder_fwd.1}
  #allocation0 [shape = 'u32[]', space=smem, size = 0x4, offset = 0x4, fixed_abs, tag = 'smem constant byte address 0x4 - core index']
  #allocation1 [shape = 'u32[144,128]{1,0:T(1,128)}', space=vmem, size = 0x12000, scoped, tag = 'internal scratch']
  %s0 = inlined_call_operand.hbm [shape: f32[256,25], index: 0, kind: input, shape index: {}]
  %s1 = inlined_call_operand.hbm [shape: f32[25,64], index: 1, kind: input, shape index: {}]
  %s2 = inlined_call_operand.vmem [shape: f32[1,64], index: 2, kind: input, shape index: {}]
  %s3 = inlined_call_operand.hbm [shape: f32[256,64], index: 3, kind: output, shape index: {}]
  %s4 = sld [smem:[#allocation0]]
  $region30: #{extra_msa_embedder_fwd.1} parent=0
    _
  %s6 = ssub.s32 1, %s4
  %s7 = scalar_select 0, %s6, %s4
  $region1: #{extra_msa_embedder_fwd.1} parent=0
    #allocation2 [shape = 'u8[131072]{0}', space=vmem, size = 0x20000, scoped, tag = 'input window, operand 0, single buffered']
    #allocation3 [shape = 's32[1]{0}', space=sflag, size = 0x4, scoped, tag = 'scoped memory for extra_msa_embedder_fwd.1']
    #allocation4 [shape = 's32[1]{0}', space=sflag, size = 0x4, scoped, tag = 'scoped memory for extra_msa_embedder_fwd.1']
    #allocation5 [shape = 'u8[16384]{0}', space=vmem, size = 0x4000, scoped, tag = 'input window, operand 1, single buffered']
    #allocation6 [shape = 's32[1]{0}', space=sflag, size = 0x4, scoped, tag = 'scoped memory for extra_msa_embedder_fwd.1']
    #allocation7 [shape = 'u8[131072]{0}', space=vmem, size = 0x20000, scoped, tag = 'output window, operand 0, single buffered']
    %8 = vsyncpa [#allocation3], 0
    %9 = vsyncpa [#allocation6], 0
    %10 = vsyncpa [#allocation4], 0
    // Predicated region
    $region2: #{extra_msa_embedder_fwd.1} parent=1 // pred_check
      _
    $region3: #{extra_msa_embedder_fwd.1} parent=1 // pred_check_branch
      %12 = sbr.rel (0) target = $region5
    $region4: #{extra_msa_embedder_fwd.1} parent=1 // pred_region
      %s14 = ssub.s32 4096, 4096
      %15 = vsyncadd [#allocation3], %s14
      %s16 = sshll.u32 [#allocation2], 4
      %s17 = int_to_ptr.vmem [resolvable:$true] %s16
      %22 = dma.hbm_to_vmem [thread:$0]  %s0, 4096, %s17, [#allocation3], 128, 128, 8
    $region5: #{extra_msa_embedder_fwd.1} parent=1 // pred_fallthru
      _
    // Predicated region
    $region6: #{extra_msa_embedder_fwd.1} parent=1 // pred_check
      _
    $region7: #{extra_msa_embedder_fwd.1} parent=1 // pred_check_branch
      %24 = sbr.rel (0) target = $region9
    $region8: #{extra_msa_embedder_fwd.1} parent=1 // pred_region
      %s26 = ssub.s32 512, 512
      %27 = vsyncadd [#allocation6], %s26
      %s28 = sshll.u32 [#allocation5], 4
      %s29 = int_to_ptr.vmem [resolvable:$true] %s28
      %34 = dma.hbm_to_vmem [thread:$0]  %s1, 512, %s29, [#allocation6], 128, 128, 8
    $region9: #{extra_msa_embedder_fwd.1} parent=1 // pred_fallthru
      _
    // Predicated region
    $region10: #{extra_msa_embedder_fwd.1} parent=1 // pred_check
      _
    $region11: #{extra_msa_embedder_fwd.1} parent=1 // pred_check_branch
      %36 = sbr.rel (0) target = $region13
    $region12: #{extra_msa_embedder_fwd.1} parent=1 // pred_region
      _
    $region13: #{extra_msa_embedder_fwd.1} parent=1 // pred_fallthru
      _
    // Predicated region
    $region14: #{extra_msa_embedder_fwd.1} parent=1 // pred_check
      _
    $region15: #{extra_msa_embedder_fwd.1} parent=1 // pred_check_branch
      %38 = sbr.rel (0) target = $region17
    $region16: #{extra_msa_embedder_fwd.1} parent=1 // pred_region
      %39 = dma.done [#allocation3], 4096
    $region17: #{extra_msa_embedder_fwd.1} parent=1 // pred_fallthru
      _
    // Predicated region
    $region18: #{extra_msa_embedder_fwd.1} parent=1 // pred_check
      _
    $region19: #{extra_msa_embedder_fwd.1} parent=1 // pred_check_branch
      %41 = sbr.rel (0) target = $region21
    $region20: #{extra_msa_embedder_fwd.1} parent=1 // pred_region
      %42 = dma.done [#allocation6], 512
    $region21: #{extra_msa_embedder_fwd.1} parent=1 // pred_fallthru
      _
    %v43 = vld [vmem:[#allocation2] sm:$0xff]
    %v44 = vld [vmem:[#allocation2 + $0x8] sm:$0xff]
    %v45 = vld [vmem:[#allocation2 + $0x10] sm:$0xff]
    %v46 = vld [vmem:[#allocation2 + $0x18] sm:$0xff]
    %v47 = vld [vmem:[#allocation2 + $0x20] sm:$0xff]
    %v48 = vld [vmem:[#allocation2 + $0x28] sm:$0xff]
    %v49 = vld [vmem:[#allocation2 + $0x30] sm:$0xff]
    %v50 = vld [vmem:[#allocation2 + $0x38] sm:$0xff]
    %v51 = vld [vmem:[#allocation2 + $0x40] sm:$0xff]
    %v52 = vld [vmem:[#allocation2 + $0x48] sm:$0xff]
    %v53 = vld [vmem:[#allocation2 + $0x50] sm:$0xff]
    %v54 = vld [vmem:[#allocation2 + $0x58] sm:$0xff]
    %v55 = vld [vmem:[#allocation2 + $0x60] sm:$0xff]
    %v56 = vld [vmem:[#allocation2 + $0x68] sm:$0xff]
    %v57 = vld [vmem:[#allocation2 + $0x70] sm:$0xff]
    %v58 = vld [vmem:[#allocation2 + $0x78] sm:$0xff]
    %v59 = vld [vmem:[#allocation2 + $0x80] sm:$0xff]
    %v60 = vld [vmem:[#allocation2 + $0x88] sm:$0xff]
    %v61 = vld [vmem:[#allocation2 + $0x90] sm:$0xff]
    %v62 = vld [vmem:[#allocation2 + $0x98] sm:$0xff]
    %v63 = vld [vmem:[#allocation2 + $0xa0] sm:$0xff]
    %v64 = vld [vmem:[#allocation2 + $0xa8] sm:$0xff]
    %v65 = vld [vmem:[#allocation2 + $0xb0] sm:$0xff]
    %v66 = vld [vmem:[#allocation2 + $0xb8] sm:$0xff]
    %v67 = vld [vmem:[#allocation2 + $0xc0] sm:$0xff]
    %v68 = vld [vmem:[#allocation2 + $0xc8] sm:$0xff]
    %v69 = vld [vmem:[#allocation2 + $0xd0] sm:$0xff]
    %v70 = vld [vmem:[#allocation2 + $0xd8] sm:$0xff]
    %v71 = vld [vmem:[#allocation2 + $0xe0] sm:$0xff]
    %v72 = vld [vmem:[#allocation2 + $0xe8] sm:$0xff]
    %v73 = vld [vmem:[#allocation2 + $0xf0] sm:$0xff]
    %v74 = vld [vmem:[#allocation2 + $0xf8] sm:$0xff]
    %v75 = vld [vmem:[#allocation5] sm:$0xff]
    %v76 = vld [vmem:[#allocation5 + $0x8] sm:$0xff]
    %v77 = vld [vmem:[#allocation5 + $0x10] sm:$0xff]
    %v78 = vld [vmem:[#allocation5 + $0x18] sm:$0x1]
    %v79 = vld [vmem:[%s2] sm:$0x1]
    %v81 = vlaneseq
    %v82 = vshrl.u32 %v81, 7
    %v83 = vsub.s32 0, %v82
    %v84 = vrot.slane %v79, %v83
    %vm86 = vcmask 203776
    %v88 = vsel %vm86, %v43, 0
    %v91 = vsel %vm86, %v44, 0
    %v94 = vsel %vm86, %v45, 0
    %v97 = vsel %vm86, %v46, 0
    %v100 = vsel %vm86, %v47, 0
    %v103 = vsel %vm86, %v48, 0
    %v106 = vsel %vm86, %v49, 0
    %v109 = vsel %vm86, %v50, 0
    %v112 = vsel %vm86, %v51, 0
    %v115 = vsel %vm86, %v52, 0
    %v118 = vsel %vm86, %v53, 0
    %v121 = vsel %vm86, %v54, 0
    %v124 = vsel %vm86, %v55, 0
    %v127 = vsel %vm86, %v56, 0
    %v130 = vsel %vm86, %v57, 0
    %v133 = vsel %vm86, %v58, 0
    %v136 = vsel %vm86, %v59, 0
    %v139 = vsel %vm86, %v60, 0
    %v142 = vsel %vm86, %v61, 0
    %v145 = vsel %vm86, %v62, 0
    %v148 = vsel %vm86, %v63, 0
    %v151 = vsel %vm86, %v64, 0
    %v154 = vsel %vm86, %v65, 0
    %v157 = vsel %vm86, %v66, 0
    %v160 = vsel %vm86, %v67, 0
    %v163 = vsel %vm86, %v68, 0
    %v166 = vsel %vm86, %v69, 0
    %v169 = vsel %vm86, %v70, 0
    %v172 = vsel %vm86, %v71, 0
    %v175 = vsel %vm86, %v72, 0
    %v178 = vsel %vm86, %v73, 0
    %v181 = vsel %vm86, %v74, 0
    %vm183 = vcmask 1040384
    %v185 = vsel %vm183, %v78, 0
    %187 = vmatprep.subr.mxu0 0.0
    %188 = vmatpush1.msra.mxu0 %v75
    %189 = vmatprep.subr.mxu0 0.0
    %190 = vmatpush1.msra.mxu0 %v76
    %191 = vmatprep.subr.mxu0 0.0
    %192 = vmatpush1.msra.mxu0 %v77
    %193 = vmatprep.subr.mxu0 0.0
    %194 = vmatpush1.msra.mxu0 %v185
    %195 = vmatprep.subr.mxu0 0.0
    %196 = vmatpush1.msra.mxu0 0.0
    %197 = vmatprep.subr.mxu0 0.0
    %198 = vmatpush1.msra.mxu0 0.0
    %199 = vmatprep.subr.mxu0 0.0
    %200 = vmatpush1.msra.mxu0 0.0
    %201 = vmatprep.subr.mxu0 0.0
    %202 = vmatpush1.msra.mxu0 0.0
    %203 = vmatprep.subr.mxu0 0.0
    %204 = vmatpush1.msra.mxu0 0.0
    %205 = vmatprep.subr.mxu0 0.0
    %206 = vmatpush1.msra.mxu0 0.0
    %207 = vmatprep.subr.mxu0 0.0
    %208 = vmatpush1.msra.mxu0 0.0
    %209 = vmatprep.subr.mxu0 0.0
    %210 = vmatpush1.msra.mxu0 0.0
    %211 = vmatprep.subr.mxu0 0.0
    %212 = vmatpush1.msra.mxu0 0.0
    %213 = vmatprep.subr.mxu0 0.0
    %214 = vmatpush1.msra.mxu0 0.0
    %215 = vmatprep.subr.mxu0 0.0
    %216 = vmatpush1.msra.mxu0 0.0
    %217 = vmatprep.subr.mxu0 0.0
    %218 = vmatpush1.msra.mxu0 0.0
    %219 = vmatprep.subr.mxu0 0.0
    %220 = vmatpush1.msra.mxu0 0.0
    %221 = vmatprep.subr.mxu0 0.0
    %222 = vmatpush1.msra.mxu0 0.0
    %223 = vmatprep.subr.mxu0 0.0
    %224 = vmatpush1.msra.mxu0 0.0
    %225 = vmatprep.subr.mxu0 0.0
    %226 = vmatpush1.msra.mxu0 0.0
    %227 = vmatprep.subr.mxu0 0.0
    %228 = vmatpush1.msra.mxu0 0.0
    %229 = vmatprep.subr.mxu0 0.0
    %230 = vmatpush1.msra.mxu0 0.0
    %231 = vmatprep.subr.mxu0 0.0
    %232 = vmatpush1.msra.mxu0 0.0
    %233 = vmatprep.subr.mxu0 0.0
    %234 = vmatpush1.msra.mxu0 0.0
    %235 = vmatprep.subr.mxu0 0.0
    %236 = vmatpush1.msra.mxu0 0.0
    %237 = vmatprep.subr.mxu0 0.0
    %238 = vmatpush1.msra.mxu0 0.0
    %239 = vmatprep.subr.mxu0 0.0
    %240 = vmatpush1.msra.mxu0 0.0
    %241 = vmatprep.subr.mxu0 0.0
    %242 = vmatpush1.msra.mxu0 0.0
    %243 = vmatprep.subr.mxu0 0.0
    %244 = vmatpush1.msra.mxu0 0.0
    %245 = vmatprep.subr.mxu0 0.0
    %246 = vmatpush1.msra.mxu0 0.0
    %247 = vmatprep.subr.mxu0 0.0
    %248 = vmatpush1.msra.mxu0 0.0
    %249 = vmatprep.subr.mxu0 0.0
    %250 = vmatpush1.msra.mxu0 0.0
    %251 = vmatprep.mubr.f32.mxu0 0.0
    %252 = vmatmul.mubr.f32.gmra.mrb[0].mxu0 %v88
    %v253 = vpop.f32.mrb[0].mxu0
    %v254 = vadd.f32 %v84, %v253
    %v255 = vpop.f32.mrb[0].mxu0
    %256 = vmatprep.mubr.f32.mxu0 0.0
    %257 = vmatmul.mubr.f32.gmra.mrb[0].mxu0 %v91
    %v258 = vpop.f32.mrb[0].mxu0
    %v259 = vadd.f32 %v84, %v258
    %v260 = vpop.f32.mrb[0].mxu0
    %261 = vmatprep.mubr.f32.mxu0 0.0
    %262 = vmatmul.mubr.f32.gmra.mrb[0].mxu0 %v94
    %v263 = vpop.f32.mrb[0].mxu0
    %v264 = vadd.f32 %v84, %v263
    %v265 = vpop.f32.mrb[0].mxu0
    %266 = vmatprep.mubr.f32.mxu0 0.0
    %267 = vmatmul.mubr.f32.gmra.mrb[0].mxu0 %v97
    %v268 = vpop.f32.mrb[0].mxu0
    %v269 = vadd.f32 %v84, %v268
    %v270 = vpop.f32.mrb[0].mxu0
    %271 = vmatprep.mubr.f32.mxu0 0.0
    %272 = vmatmul.mubr.f32.gmra.mrb[0].mxu0 %v100
    %v273 = vpop.f32.mrb[0].mxu0
    %v274 = vadd.f32 %v84, %v273
    %v275 = vpop.f32.mrb[0].mxu0
    %276 = vmatprep.mubr.f32.mxu0 0.0
    %277 = vmatmul.mubr.f32.gmra.mrb[0].mxu0 %v103
    %v278 = vpop.f32.mrb[0].mxu0
    %v279 = vadd.f32 %v84, %v278
    %v280 = vpop.f32.mrb[0].mxu0
    %281 = vmatprep.mubr.f32.mxu0 0.0
    %282 = vmatmul.mubr.f32.gmra.mrb[0].mxu0 %v106
    %v283 = vpop.f32.mrb[0].mxu0
    %v284 = vadd.f32 %v84, %v283
    %v285 = vpop.f32.mrb[0].mxu0
    %286 = vmatprep.mubr.f32.mxu0 0.0
    %287 = vmatmul.mubr.f32.gmra.mrb[0].mxu0 %v109
    %v288 = vpop.f32.mrb[0].mxu0
    %v289 = vadd.f32 %v84, %v288
    %v290 = vpop.f32.mrb[0].mxu0
    %291 = vmatprep.mubr.f32.mxu0 0.0
    %292 = vmatmul.mubr.f32.gmra.mrb[0].mxu0 %v112
    %v293 = vpop.f32.mrb[0].mxu0
    %v294 = vadd.f32 %v84, %v293
    %v295 = vpop.f32.mrb[0].mxu0
    %296 = vmatprep.mubr.f32.mxu0 0.0
    %297 = vmatmul.mubr.f32.gmra.mrb[0].mxu0 %v115
    %v298 = vpop.f32.mrb[0].mxu0
    %v299 = vadd.f32 %v84, %v298
    %v300 = vpop.f32.mrb[0].mxu0
    %301 = vmatprep.mubr.f32.mxu0 0.0
    %302 = vmatmul.mubr.f32.gmra.mrb[0].mxu0 %v118
    %v303 = vpop.f32.mrb[0].mxu0
    %v304 = vadd.f32 %v84, %v303
    %v305 = vpop.f32.mrb[0].mxu0
    %306 = vmatprep.mubr.f32.mxu0 0.0
    %307 = vmatmul.mubr.f32.gmra.mrb[0].mxu0 %v121
    %v308 = vpop.f32.mrb[0].mxu0
    %v309 = vadd.f32 %v84, %v308
    %v310 = vpop.f32.mrb[0].mxu0
    %311 = vmatprep.mubr.f32.mxu0 0.0
    %312 = vmatmul.mubr.f32.gmra.mrb[0].mxu0 %v124
    %v313 = vpop.f32.mrb[0].mxu0
    %v314 = vadd.f32 %v84, %v313
    %v315 = vpop.f32.mrb[0].mxu0
    %316 = vmatprep.mubr.f32.mxu0 0.0
    %317 = vmatmul.mubr.f32.gmra.mrb[0].mxu0 %v127
    %v318 = vpop.f32.mrb[0].mxu0
    %v319 = vadd.f32 %v84, %v318
    %v320 = vpop.f32.mrb[0].mxu0
    %321 = vmatprep.mubr.f32.mxu0 0.0
    %322 = vmatmul.mubr.f32.gmra.mrb[0].mxu0 %v130
    %v323 = vpop.f32.mrb[0].mxu0
    %v324 = vadd.f32 %v84, %v323
    %v325 = vpop.f32.mrb[0].mxu0
    %326 = vmatprep.mubr.f32.mxu0 0.0
    %327 = vmatmul.mubr.f32.gmra.mrb[0].mxu0 %v133
    %v328 = vpop.f32.mrb[0].mxu0
    %v329 = vadd.f32 %v84, %v328
    %v330 = vpop.f32.mrb[0].mxu0
    %331 = vmatprep.mubr.f32.mxu0 0.0
    %332 = vmatmul.mubr.f32.gmra.mrb[0].mxu0 %v136
    %v333 = vpop.f32.mrb[0].mxu0
    %v334 = vadd.f32 %v84, %v333
    %v335 = vpop.f32.mrb[0].mxu0
    %336 = vmatprep.mubr.f32.mxu0 0.0
    %337 = vmatmul.mubr.f32.gmra.mrb[0].mxu0 %v139
    %v338 = vpop.f32.mrb[0].mxu0
    %v339 = vadd.f32 %v84, %v338
    %v340 = vpop.f32.mrb[0].mxu0
    %341 = vmatprep.mubr.f32.mxu0 0.0
    %342 = vmatmul.mubr.f32.gmra.mrb[0].mxu0 %v142
    %v343 = vpop.f32.mrb[0].mxu0
    %v344 = vadd.f32 %v84, %v343
    %v345 = vpop.f32.mrb[0].mxu0
    %346 = vmatprep.mubr.f32.mxu0 0.0
    %347 = vmatmul.mubr.f32.gmra.mrb[0].mxu0 %v145
    %v348 = vpop.f32.mrb[0].mxu0
    %v349 = vadd.f32 %v84, %v348
    %v350 = vpop.f32.mrb[0].mxu0
    %351 = vmatprep.mubr.f32.mxu0 0.0
    %352 = vmatmul.mubr.f32.gmra.mrb[0].mxu0 %v148
    %v353 = vpop.f32.mrb[0].mxu0
    %v354 = vadd.f32 %v84, %v353
    %v355 = vpop.f32.mrb[0].mxu0
    %356 = vmatprep.mubr.f32.mxu0 0.0
    %357 = vmatmul.mubr.f32.gmra.mrb[0].mxu0 %v151
    %v358 = vpop.f32.mrb[0].mxu0
    %v359 = vadd.f32 %v84, %v358
    %v360 = vpop.f32.mrb[0].mxu0
    %361 = vmatprep.mubr.f32.mxu0 0.0
    %362 = vmatmul.mubr.f32.gmra.mrb[0].mxu0 %v154
    %v363 = vpop.f32.mrb[0].mxu0
    %v364 = vadd.f32 %v84, %v363
    %v365 = vpop.f32.mrb[0].mxu0
    %366 = vmatprep.mubr.f32.mxu0 0.0
    %367 = vmatmul.mubr.f32.gmra.mrb[0].mxu0 %v157
    %v368 = vpop.f32.mrb[0].mxu0
    %v369 = vadd.f32 %v84, %v368
    %v370 = vpop.f32.mrb[0].mxu0
    %371 = vmatprep.mubr.f32.mxu0 0.0
    %372 = vmatmul.mubr.f32.gmra.mrb[0].mxu0 %v160
    %v373 = vpop.f32.mrb[0].mxu0
    %v374 = vadd.f32 %v84, %v373
    %v375 = vpop.f32.mrb[0].mxu0
    %376 = vmatprep.mubr.f32.mxu0 0.0
    %377 = vmatmul.mubr.f32.gmra.mrb[0].mxu0 %v163
    %v378 = vpop.f32.mrb[0].mxu0
    %v379 = vadd.f32 %v84, %v378
    %v380 = vpop.f32.mrb[0].mxu0
    %381 = vmatprep.mubr.f32.mxu0 0.0
    %382 = vmatmul.mubr.f32.gmra.mrb[0].mxu0 %v166
    %v383 = vpop.f32.mrb[0].mxu0
    %v384 = vadd.f32 %v84, %v383
    %v385 = vpop.f32.mrb[0].mxu0
    %386 = vmatprep.mubr.f32.mxu0 0.0
    %387 = vmatmul.mubr.f32.gmra.mrb[0].mxu0 %v169
    %v388 = vpop.f32.mrb[0].mxu0
    %v389 = vadd.f32 %v84, %v388
    %v390 = vpop.f32.mrb[0].mxu0
    %391 = vmatprep.mubr.f32.mxu0 0.0
    %392 = vmatmul.mubr.f32.gmra.mrb[0].mxu0 %v172
    %v393 = vpop.f32.mrb[0].mxu0
    %v394 = vadd.f32 %v84, %v393
    %v395 = vpop.f32.mrb[0].mxu0
    %396 = vmatprep.mubr.f32.mxu0 0.0
    %397 = vmatmul.mubr.f32.gmra.mrb[0].mxu0 %v175
    %v398 = vpop.f32.mrb[0].mxu0
    %v399 = vadd.f32 %v84, %v398
    %v400 = vpop.f32.mrb[0].mxu0
    %401 = vmatprep.mubr.f32.mxu0 0.0
    %402 = vmatmul.mubr.f32.gmra.mrb[0].mxu0 %v178
    %v403 = vpop.f32.mrb[0].mxu0
    %v404 = vadd.f32 %v84, %v403
    %v405 = vpop.f32.mrb[0].mxu0
    %406 = vmatprep.mubr.f32.mxu0 0.0
    %407 = vmatmul.mubr.f32.gmra.mrb[0].mxu0 %v181
    %v408 = vpop.f32.mrb[0].mxu0
    %v409 = vadd.f32 %v84, %v408
    %v410 = vpop.f32.mrb[0].mxu0
    %411 = vdwg.mxu0
    %vm412 = vcmask 523264
    %413 = vst.msk [vmem:[#allocation7] sm:$0xff] %vm412, %v254
    %414 = vst.msk [vmem:[#allocation7 + $0x8] sm:$0xff] %vm412, %v259
    %415 = vst.msk [vmem:[#allocation7 + $0x10] sm:$0xff] %vm412, %v264
    %416 = vst.msk [vmem:[#allocation7 + $0x18] sm:$0xff] %vm412, %v269
    %417 = vst.msk [vmem:[#allocation7 + $0x20] sm:$0xff] %vm412, %v274
    %418 = vst.msk [vmem:[#allocation7 + $0x28] sm:$0xff] %vm412, %v279
    %419 = vst.msk [vmem:[#allocation7 + $0x30] sm:$0xff] %vm412, %v284
    %420 = vst.msk [vmem:[#allocation7 + $0x38] sm:$0xff] %vm412, %v289
    %421 = vst.msk [vmem:[#allocation7 + $0x40] sm:$0xff] %vm412, %v294
    %422 = vst.msk [vmem:[#allocation7 + $0x48] sm:$0xff] %vm412, %v299
    %423 = vst.msk [vmem:[#allocation7 + $0x50] sm:$0xff] %vm412, %v304
    %424 = vst.msk [vmem:[#allocation7 + $0x58] sm:$0xff] %vm412, %v309
    %425 = vst.msk [vmem:[#allocation7 + $0x60] sm:$0xff] %vm412, %v314
    %426 = vst.msk [vmem:[#allocation7 + $0x68] sm:$0xff] %vm412, %v319
    %427 = vst.msk [vmem:[#allocation7 + $0x70] sm:$0xff] %vm412, %v324
    %428 = vst.msk [vmem:[#allocation7 + $0x78] sm:$0xff] %vm412, %v329
    %429 = vst.msk [vmem:[#allocation7 + $0x80] sm:$0xff] %vm412, %v334
    %430 = vst.msk [vmem:[#allocation7 + $0x88] sm:$0xff] %vm412, %v339
    %431 = vst.msk [vmem:[#allocation7 + $0x90] sm:$0xff] %vm412, %v344
    %432 = vst.msk [vmem:[#allocation7 + $0x98] sm:$0xff] %vm412, %v349
    %433 = vst.msk [vmem:[#allocation7 + $0xa0] sm:$0xff] %vm412, %v354
    %434 = vst.msk [vmem:[#allocation7 + $0xa8] sm:$0xff] %vm412, %v359
    %435 = vst.msk [vmem:[#allocation7 + $0xb0] sm:$0xff] %vm412, %v364
    %436 = vst.msk [vmem:[#allocation7 + $0xb8] sm:$0xff] %vm412, %v369
    %437 = vst.msk [vmem:[#allocation7 + $0xc0] sm:$0xff] %vm412, %v374
    %438 = vst.msk [vmem:[#allocation7 + $0xc8] sm:$0xff] %vm412, %v379
    %439 = vst.msk [vmem:[#allocation7 + $0xd0] sm:$0xff] %vm412, %v384
    %440 = vst.msk [vmem:[#allocation7 + $0xd8] sm:$0xff] %vm412, %v389
    %441 = vst.msk [vmem:[#allocation7 + $0xe0] sm:$0xff] %vm412, %v394
    %442 = vst.msk [vmem:[#allocation7 + $0xe8] sm:$0xff] %vm412, %v399
    %443 = vst.msk [vmem:[#allocation7 + $0xf0] sm:$0xff] %vm412, %v404
    %444 = vst.msk [vmem:[#allocation7 + $0xf8] sm:$0xff] %vm412, %v409
    // Predicated region
    $region22: #{extra_msa_embedder_fwd.1} parent=1 // pred_check
      _
    $region23: #{extra_msa_embedder_fwd.1} parent=1 // pred_check_branch
      %446 = sbr.rel (0) target = $region25
    $region24: #{extra_msa_embedder_fwd.1} parent=1 // pred_region
      %s448 = ssub.s32 4096, 4096
      %449 = vsyncadd [#allocation4], %s448
      %s450 = sshll.u32 [#allocation7], 4
      %s451 = int_to_ptr.vmem [resolvable:$true] %s450
      %456 = dma.vmem_to_hbm [thread:$0]  %s451, 4096, %s3, [#allocation4], 128, 128, 8
    $region25: #{extra_msa_embedder_fwd.1} parent=1 // pred_fallthru
      _
    // Predicated region
    $region26: #{extra_msa_embedder_fwd.1} parent=1 // pred_check
      _
    $region27: #{extra_msa_embedder_fwd.1} parent=1 // pred_check_branch
      %458 = sbr.rel (0) target = $region29
    $region28: #{extra_msa_embedder_fwd.1} parent=1 // pred_region
      %459 = dma.done [#allocation4], 4096
    $region29: #{extra_msa_embedder_fwd.1} parent=1 // pred_fallthru
      _
    %460 = vsyncpa [#allocation3], 1
    %461 = vsyncpa [#allocation6], 1
    %462 = vsyncpa [#allocation4], 1

</llo_original>
